<compile_context>
chip_gen: v6e
topology: v6e:2x2x1
jax: 0.10.0
libtpu: 0.0.40
codegen_flags: <defaults>
</compile_context>

<pallas_src>
import functools

import jax
import jax.numpy as jnp
from jax.experimental import pallas as pl
from jax.experimental.pallas import tpu as pltpu

OUT_FEATURES = 32   # input feature dim of the encoder (matches the PyTorch module)
H1 = 512
H2 = 256


def _round_up(x, m):
    return ((x + m - 1) // m) * m


def _choose_block_b(B, block_b=None):
    """Pick a batch tile: big enough to feed the MXU, >=2 tiles when cheap."""
    if block_b is not None:
        return block_b
    if B <= 512:
        # Two tiles (>=128 rows each) when the split is clean, so the second
        # v7x TensorCore has work; otherwise one full-batch tile (block ==
        # array dim is always a legal block shape).
        if B >= 256 and B % 16 == 0:
            return B // 2
        return B
    # Large batch: 1024-row tiles (multiple of 8 for sublane alignment; the
    # per-tile VMEM footprint at out_pad=128 is only ~1.5 MiB double-buffered,
    # and bigger tiles amortize the ~0.35us per-grid-step overhead). The
    # ragged last tile is handled by Pallas with masked writes.
    return 1024


def _mlp_kernel(x_ref, w1_ref, b1_ref, w2_ref, b2_ref, w3_ref, b3_ref, o_ref):
    # Fused 3-layer MLP on one batch tile. All operands are resident in VMEM.
    # Dots take inputs in the weights' dtype (f32 or bf16) but always
    # accumulate in f32; bias add + ReLU stay in f32 (v5e VPU has no bf16 ALU).
    cdt = w1_ref.dtype
    x = x_ref[...]
    h1 = jnp.dot(x, w1_ref[...], preferred_element_type=jnp.float32) + b1_ref[...]
    h1 = jnp.maximum(h1, 0.0).astype(cdt)
    h2 = jnp.dot(h1, w2_ref[...], preferred_element_type=jnp.float32) + b2_ref[...]
    h2 = jnp.maximum(h2, 0.0).astype(cdt)
    out = jnp.dot(h2, w3_ref[...], preferred_element_type=jnp.float32) + b3_ref[...]
    o_ref[...] = out.astype(o_ref.dtype)


@functools.partial(jax.jit, static_argnames=("block_b", "compute_dtype"))
def encoder_forward(x, params, block_b=None, compute_dtype=jnp.float32):
    """Run the Encoder MLP with a single fused Pallas kernel, tiled over batch.

    compute_dtype=jnp.bfloat16 feeds the MXU with native bf16 inputs
    (f32 accumulation) — recommended on v6e/v7x.
    """
    w1, b1, w2, b2, w3, b3 = params
    B = x.shape[0]
    out_dim = w3.shape[1]

    # Lane-dense output: pad the last layer to a multiple of 128 columns so the
    # store path uses unmasked full-width vst instead of masked partial stores.
    out_pad = _round_up(out_dim, 128)
    if out_pad != out_dim:
        w3 = jnp.pad(w3, ((0, 0), (0, out_pad - out_dim)))
        b3 = jnp.pad(b3, ((0, 0), (0, out_pad - out_dim)))

    if compute_dtype != jnp.float32:
        x = x.astype(compute_dtype)
        w1 = w1.astype(compute_dtype)
        w2 = w2.astype(compute_dtype)
        w3 = w3.astype(compute_dtype)

    bb = _choose_block_b(B, block_b)
    grid = (pl.cdiv(B, bb),)

    # Weights/biases use a constant index_map (same full block every tile, so
    # they stay VMEM-resident); only the activation tile advances with the grid.
    def full(arr):
        nd = arr.ndim
        return pl.BlockSpec(arr.shape, lambda i, _nd=nd: (0,) * _nd)

    # Advisory cost hint for XLA's scheduler around the custom call.
    flops = 2 * B * (OUT_FEATURES * H1 + H1 * H2 + H2 * out_pad)
    bytes_accessed = (
        x.size * x.dtype.itemsize
        + sum(a.size * a.dtype.itemsize for a in (w1, b1, w2, b2, w3, b3))
        + B * out_pad * 4
    )
    cost = pl.CostEstimate(flops=flops, transcendentals=0,
                           bytes_accessed=bytes_accessed)

    out = pl.pallas_call(
        _mlp_kernel,
        out_shape=jax.ShapeDtypeStruct((B, out_pad), jnp.float32),
        grid_spec=pltpu.PrefetchScalarGridSpec(
            num_scalar_prefetch=0,
            grid=grid,
            in_specs=[
                pl.BlockSpec((bb, OUT_FEATURES), lambda i: (i, 0)),
                full(w1), full(b1),
                full(w2), full(b2),
                full(w3), full(b3),
            ],
            out_specs=pl.BlockSpec((bb, out_pad), lambda i: (i, 0)),
        ),
        compiler_params=pltpu.CompilerParams(
            dimension_semantics=("parallel",),
            # Explicit scoped-VMEM budget: at bb=1024 the double-buffered
            # activation/output tiles + resident weights + f32 intermediates
            # are only a few MiB, but pin it so bigger tiles don't brush
            # v5e's 16 MiB default.
            vmem_limit_bytes=32 * 1024 * 1024,
        ),
        cost_estimate=cost,
    )(x, w1, b1, w2, b2, w3, b3)

    if out_pad != out_dim:
        out = out[:, :out_dim]
    return out


def init_params(key, output_dim):
    """Deterministic synthetic parameters (shapes match the PyTorch __init__)."""
    ks = jax.random.split(key, 6)
    # Stored as (in, out) so the kernel does x @ W + b.
    w1 = jax.random.normal(ks[0], (OUT_FEATURES, H1), jnp.float32) * 0.05
    b1 = jax.random.normal(ks[1], (1, H1), jnp.float32) * 0.01
    w2 = jax.random.normal(ks[2], (H1, H2), jnp.float32) * 0.05
    b2 = jax.random.normal(ks[3], (1, H2), jnp.float32) * 0.01
    w3 = jax.random.normal(ks[4], (H2, output_dim), jnp.float32) * 0.05
    b3 = jax.random.normal(ks[5], (1, output_dim), jnp.float32) * 0.01
    return (w1, b1, w2, b2, w3, b3)


def encoder_reference(x, params):
    w1, b1, w2, b2, w3, b3 = params
    h1 = jnp.maximum(x @ w1 + b1, 0.0)
    h2 = jnp.maximum(h1 @ w2 + b2, 0.0)
    return h2 @ w3 + b3


if __name__ == "__main__":
    key = jax.random.PRNGKey(0)
    k_x, k_p = jax.random.split(key)

    batch = 8
    output_dim = 64

    x = jax.random.normal(k_x, (batch, OUT_FEATURES), jnp.float32)
    params = init_params(k_p, output_dim)
    ref = encoder_reference(x, params)

    # 1) f32 path (exact vs reference), single full-batch tile.
    out_f32 = jax.block_until_ready(encoder_forward(x, params))
    assert out_f32.shape == (batch, output_dim), out_f32.shape
    assert jnp.allclose(out_f32, ref, atol=1e-4, rtol=1e-4), "f32 mismatch vs reference"

    # 2) bf16 MXU-input path (f32 accumulation) — looser tolerance.
    out_bf16 = jax.block_until_ready(
        encoder_forward(x, params, compute_dtype=jnp.bfloat16)
    )
    assert out_bf16.shape == (batch, output_dim), out_bf16.shape
    assert jnp.allclose(out_bf16, ref, atol=5e-2, rtol=5e-2), "bf16 mismatch vs reference"

    # 3) Multi-tile grid (3 programs, 16-row tiles) to exercise batch tiling.
    batch2 = 48
    x2 = jax.random.normal(k_x, (batch2, OUT_FEATURES), jnp.float32)
    ref2 = encoder_reference(x2, params)
    out2 = jax.block_until_ready(encoder_forward(x2, params, block_b=16))
    assert out2.shape == (batch2, output_dim), out2.shape
    assert jnp.allclose(out2, ref2, atol=1e-4, rtol=1e-4), "tiled mismatch vs reference"

    print("KERNEL_OK")
</pallas_src>

<mosaic_0001>
module attributes {stable_mosaic.version = 11 : i64} {
  func.func @_mlp_kernel(%arg0: i32, %arg1: memref<8x32xf32, #tpu.memory_space<vmem>>, %arg2: memref<32x512xf32, #tpu.memory_space<vmem>>, %arg3: memref<1x512xf32, #tpu.memory_space<vmem>>, %arg4: memref<512x256xf32, #tpu.memory_space<vmem>>, %arg5: memref<1x256xf32, #tpu.memory_space<vmem>>, %arg6: memref<256x128xf32, #tpu.memory_space<vmem>>, %arg7: memref<1x128xf32, #tpu.memory_space<vmem>>, %arg8: memref<8x128xf32, #tpu.memory_space<vmem>>) attributes {dimension_semantics = [#tpu.dimension_semantics<parallel>], iteration_bounds = array<i64: 1>, scalar_prefetch = 0 : i64, scratch_operands = 0 : i64, tpu.core_type = #tpu.core_type<tc>, window_params = [{transform_indices = @transform_0, window_bounds = array<i64: 8, 32>}, {pipeline_mode = #tpu.pipeline_mode<synchronous>, transform_indices = @transform_1, window_bounds = array<i64: 32, 512>}, {pipeline_mode = #tpu.pipeline_mode<synchronous>, transform_indices = @transform_2, window_bounds = array<i64: 1, 512>}, {pipeline_mode = #tpu.pipeline_mode<synchronous>, transform_indices = @transform_3, window_bounds = array<i64: 512, 256>}, {pipeline_mode = #tpu.pipeline_mode<synchronous>, transform_indices = @transform_4, window_bounds = array<i64: 1, 256>}, {pipeline_mode = #tpu.pipeline_mode<synchronous>, transform_indices = @transform_5, window_bounds = array<i64: 256, 128>}, {pipeline_mode = #tpu.pipeline_mode<synchronous>, transform_indices = @transform_6, window_bounds = array<i64: 1, 128>}, {transform_indices = @transform_7, window_bounds = array<i64: 8, 128>}]} {
    %c0 = arith.constant 0 : index
    %c0_0 = arith.constant 0 : index
    %0 = vector.load %arg1[%c0, %c0_0] : memref<8x32xf32, #tpu.memory_space<vmem>>, vector<8x32xf32>
    %c0_1 = arith.constant 0 : index
    %c0_2 = arith.constant 0 : index
    %1 = vector.load %arg2[%c0_1, %c0_2] : memref<32x512xf32, #tpu.memory_space<vmem>>, vector<32x512xf32>
    %cst = arith.constant dense<0.000000e+00> : vector<8x512xf32>
    %2 = tpu.matmul %0, %1, %cst {dimension_numbers = #tpu.dot_dimension_numbers<[1], [0], [0], [1], [0, 0, 1, 1], [], []>} : vector<8x32xf32>, vector<32x512xf32>, vector<8x512xf32> -> vector<8x512xf32>
    %c0_3 = arith.constant 0 : index
    %c0_4 = arith.constant 0 : index
    %3 = vector.load %arg3[%c0_3, %c0_4] : memref<1x512xf32, #tpu.memory_space<vmem>>, vector<1x512xf32>
    %4 = vector.broadcast %3 : vector<1x512xf32> to vector<8x512xf32>
    %5 = arith.addf %2, %4 : vector<8x512xf32>
    %cst_5 = arith.constant 0.000000e+00 : f32
    %6 = vector.broadcast %cst_5 : f32 to vector<8x512xf32>
    %7 = arith.maximumf %5, %6 : vector<8x512xf32>
    %c0_6 = arith.constant 0 : index
    %c0_7 = arith.constant 0 : index
    %8 = vector.load %arg4[%c0_6, %c0_7] : memref<512x256xf32, #tpu.memory_space<vmem>>, vector<512x256xf32>
    %cst_8 = arith.constant dense<0.000000e+00> : vector<8x256xf32>
    %9 = tpu.matmul %7, %8, %cst_8 {dimension_numbers = #tpu.dot_dimension_numbers<[1], [0], [0], [1], [0, 0, 1, 1], [], []>} : vector<8x512xf32>, vector<512x256xf32>, vector<8x256xf32> -> vector<8x256xf32>
    %c0_9 = arith.constant 0 : index
    %c0_10 = arith.constant 0 : index
    %10 = vector.load %arg5[%c0_9, %c0_10] : memref<1x256xf32, #tpu.memory_space<vmem>>, vector<1x256xf32>
    %11 = vector.broadcast %10 : vector<1x256xf32> to vector<8x256xf32>
    %12 = arith.addf %9, %11 : vector<8x256xf32>
    %cst_11 = arith.constant 0.000000e+00 : f32
    %13 = vector.broadcast %cst_11 : f32 to vector<8x256xf32>
    %14 = arith.maximumf %12, %13 : vector<8x256xf32>
    %c0_12 = arith.constant 0 : index
    %c0_13 = arith.constant 0 : index
    %15 = vector.load %arg6[%c0_12, %c0_13] : memref<256x128xf32, #tpu.memory_space<vmem>>, vector<256x128xf32>
    %cst_14 = arith.constant dense<0.000000e+00> : vector<8x128xf32>
    %16 = tpu.matmul %14, %15, %cst_14 {dimension_numbers = #tpu.dot_dimension_numbers<[1], [0], [0], [1], [0, 0, 1, 1], [], []>} : vector<8x256xf32>, vector<256x128xf32>, vector<8x128xf32> -> vector<8x128xf32>
    %c0_15 = arith.constant 0 : index
    %c0_16 = arith.constant 0 : index
    %17 = vector.load %arg7[%c0_15, %c0_16] : memref<1x128xf32, #tpu.memory_space<vmem>>, vector<1x128xf32>
    %18 = vector.broadcast %17 : vector<1x128xf32> to vector<8x128xf32>
    %19 = arith.addf %16, %18 : vector<8x128xf32>
    %c0_17 = arith.constant 0 : index
    %c0_18 = arith.constant 0 : index
    %20 = vector.load %arg8[%c0_17, %c0_18] : memref<8x128xf32, #tpu.memory_space<vmem>>, vector<8x128xf32>
    tpu.vector_store %arg8[%c0_17, %c0_18], %19 {strides = array<i32>} : memref<8x128xf32, #tpu.memory_space<vmem>>, vector<8x128xf32>,
    return
  }
  func.func @transform_0(%arg0: i32) -> (i32, i32) {
    %c0_i32 = arith.constant 0 : i32
    %c0_i32_0 = arith.constant 0 : i32
    return %arg0, %c0_i32 : i32, i32
  }
  func.func @transform_1(%arg0: i32) -> (i32, i32) {
    %c0_i32 = arith.constant 0 : i32
    %c0_i32_0 = arith.constant 0 : i32
    %c0_i32_1 = arith.constant 0 : i32
    return %c0_i32, %c0_i32_0 : i32, i32
  }
  func.func @transform_2(%arg0: i32) -> (i32, i32) {
    %c0_i32 = arith.constant 0 : i32
    %c0_i32_0 = arith.constant 0 : i32
    %c0_i32_1 = arith.constant 0 : i32
    return %c0_i32, %c0_i32_0 : i32, i32
  }
  func.func @transform_3(%arg0: i32) -> (i32, i32) {
    %c0_i32 = arith.constant 0 : i32
    %c0_i32_0 = arith.constant 0 : i32
    %c0_i32_1 = arith.constant 0 : i32
    return %c0_i32, %c0_i32_0 : i32, i32
  }
  func.func @transform_4(%arg0: i32) -> (i32, i32) {
    %c0_i32 = arith.constant 0 : i32
    %c0_i32_0 = arith.constant 0 : i32
    %c0_i32_1 = arith.constant 0 : i32
    return %c0_i32, %c0_i32_0 : i32, i32
  }
  func.func @transform_5(%arg0: i32) -> (i32, i32) {
    %c0_i32 = arith.constant 0 : i32
    %c0_i32_0 = arith.constant 0 : i32
    %c0_i32_1 = arith.constant 0 : i32
    return %c0_i32, %c0_i32_0 : i32, i32
  }
  func.func @transform_6(%arg0: i32) -> (i32, i32) {
    %c0_i32 = arith.constant 0 : i32
    %c0_i32_0 = arith.constant 0 : i32
    %c0_i32_1 = arith.constant 0 : i32
    return %c0_i32, %c0_i32_0 : i32, i32
  }
  func.func @transform_7(%arg0: i32) -> (i32, i32) {
    %c0_i32 = arith.constant 0 : i32
    %c0_i32_0 = arith.constant 0 : i32
    return %arg0, %c0_i32 : i32, i32
  }
}

</mosaic_0001>

<llo_original>
// kernel: encoder_forward.1
$region0: #{encoder_forward.1}
  #allocation0 [shape = 'u32[]', space=smem, size = 0x4, offset = 0x4, fixed_abs, tag = 'smem constant byte address 0x4 - core index']
  #allocation1 [shape = 'u32[144,128]{1,0:T(1,128)}', space=vmem, size = 0x12000, scoped, tag = 'internal scratch']
  %s0 = inlined_call_operand.vmem [shape: f32[8,32], index: 0, kind: input, shape index: {}]
  %s1 = inlined_call_operand.vmem [shape: f32[32,512], index: 1, kind: input, shape index: {}]
  %s2 = inlined_call_operand.vmem [shape: f32[1,512], index: 2, kind: input, shape index: {}]
  %s3 = inlined_call_operand.hbm [shape: f32[512,256], index: 3, kind: input, shape index: {}]
  %s4 = inlined_call_operand.vmem [shape: f32[1,256], index: 4, kind: input, shape index: {}]
  %s5 = inlined_call_operand.vmem [shape: f32[256,128], index: 5, kind: input, shape index: {}]
  %s6 = inlined_call_operand.vmem [shape: f32[1,128], index: 6, kind: input, shape index: {}]
  %s7 = inlined_call_operand.hbm [shape: f32[8,128], index: 7, kind: output, shape index: {}]
  %s8 = sld [smem:[#allocation0]]
  $region42: #{encoder_forward.1} parent=0
    _
  %s10 = ssub.s32 1, %s8
  %s11 = scalar_select 0, %s10, %s8
  $region1: #{encoder_forward.1} parent=0
    #allocation2 [shape = 'u8[524288]{0}', space=vmem, size = 0x80000, scoped, tag = 'input window, operand 3, single buffered']
    #allocation3 [shape = 's32[1]{0}', space=sflag, size = 0x4, scoped, tag = 'scoped memory for encoder_forward.1']
    #allocation4 [shape = 's32[1]{0}', space=sflag, size = 0x4, scoped, tag = 'scoped memory for encoder_forward.1']
    #allocation5 [shape = 'u8[4096]{0}', space=vmem, size = 0x1000, scoped, tag = 'output window, operand 0, single buffered']
    %12 = vsyncpa [#allocation3], 0
    %13 = vsyncpa [#allocation4], 0
    // Predicated region
    $region2: #{encoder_forward.1} parent=1 // pred_check
      _
    $region3: #{encoder_forward.1} parent=1 // pred_check_branch
      %15 = sbr.rel (0) target = $region5
    $region4: #{encoder_forward.1} parent=1 // pred_region
      _
    $region5: #{encoder_forward.1} parent=1 // pred_fallthru
      _
    // Predicated region
    $region6: #{encoder_forward.1} parent=1 // pred_check
      _
    $region7: #{encoder_forward.1} parent=1 // pred_check_branch
      %17 = sbr.rel (0) target = $region9
    $region8: #{encoder_forward.1} parent=1 // pred_region
      _
    $region9: #{encoder_forward.1} parent=1 // pred_fallthru
      _
    // Predicated region
    $region10: #{encoder_forward.1} parent=1 // pred_check
      _
    $region11: #{encoder_forward.1} parent=1 // pred_check_branch
      %19 = sbr.rel (0) target = $region13
    $region12: #{encoder_forward.1} parent=1 // pred_region
      _
    $region13: #{encoder_forward.1} parent=1 // pred_fallthru
      _
    // Predicated region
    $region14: #{encoder_forward.1} parent=1 // pred_check
      _
    $region15: #{encoder_forward.1} parent=1 // pred_check_branch
      %21 = sbr.rel (0) target = $region17
    $region16: #{encoder_forward.1} parent=1 // pred_region
      %s23 = ssub.s32 16384, 16384
      %24 = vsyncadd [#allocation3], %s23
      %s25 = sshll.u32 [#allocation2], 4
      %s26 = int_to_ptr.vmem [resolvable:$true] %s25
      %31 = dma.hbm_to_vmem [thread:$0]  %s3, 16384, %s26, [#allocation3], 256, 256, 16
    $region17: #{encoder_forward.1} parent=1 // pred_fallthru
      _
    // Predicated region
    $region18: #{encoder_forward.1} parent=1 // pred_check
      _
    $region19: #{encoder_forward.1} parent=1 // pred_check_branch
      %33 = sbr.rel (0) target = $region21
    $region20: #{encoder_forward.1} parent=1 // pred_region
      _
    $region21: #{encoder_forward.1} parent=1 // pred_fallthru
      _
    // Predicated region
    $region22: #{encoder_forward.1} parent=1 // pred_check
      _
    $region23: #{encoder_forward.1} parent=1 // pred_check_branch
      %35 = sbr.rel (0) target = $region25
    $region24: #{encoder_forward.1} parent=1 // pred_region
      _
    $region25: #{encoder_forward.1} parent=1 // pred_fallthru
      _
    // Predicated region
    $region26: #{encoder_forward.1} parent=1 // pred_check
      _
    $region27: #{encoder_forward.1} parent=1 // pred_check_branch
      %37 = sbr.rel (0) target = $region29
    $region28: #{encoder_forward.1} parent=1 // pred_region
      _
    $region29: #{encoder_forward.1} parent=1 // pred_fallthru
      _
    // Predicated region
    $region30: #{encoder_forward.1} parent=1 // pred_check
      _
    $region31: #{encoder_forward.1} parent=1 // pred_check_branch
      %39 = sbr.rel (0) target = $region33
    $region32: #{encoder_forward.1} parent=1 // pred_region
      %40 = dma.done [#allocation3], 16384
    $region33: #{encoder_forward.1} parent=1 // pred_fallthru
      _
    %v41 = vld [vmem:[%s0] sm:$0xff]
    %v42 = vld [vmem:[%s1] sm:$0xff]
    %v43 = vld [vmem:[%s1 + $0x8] sm:$0xff]
    %v44 = vld [vmem:[%s1 + $0x10] sm:$0xff]
    %v45 = vld [vmem:[%s1 + $0x18] sm:$0xff]
    %v46 = vld [vmem:[%s1 + $0x20] sm:$0xff]
    %v47 = vld [vmem:[%s1 + $0x28] sm:$0xff]
    %v48 = vld [vmem:[%s1 + $0x30] sm:$0xff]
    %v49 = vld [vmem:[%s1 + $0x38] sm:$0xff]
    %v50 = vld [vmem:[%s1 + $0x40] sm:$0xff]
    %v51 = vld [vmem:[%s1 + $0x48] sm:$0xff]
    %v52 = vld [vmem:[%s1 + $0x50] sm:$0xff]
    %v53 = vld [vmem:[%s1 + $0x58] sm:$0xff]
    %v54 = vld [vmem:[%s1 + $0x60] sm:$0xff]
    %v55 = vld [vmem:[%s1 + $0x68] sm:$0xff]
    %v56 = vld [vmem:[%s1 + $0x70] sm:$0xff]
    %v57 = vld [vmem:[%s1 + $0x78] sm:$0xff]
    %v58 = vld [vmem:[%s2] sm:$0xf]
    %v60 = vlaneseq
    %v61 = vshrl.u32 %v60, 7
    %v62 = vsub.s32 0, %v61
    %v63 = vrot.slane %v58, %v62
    %v64 = vlaneseq
    %v65 = vshrl.u32 %v64, 7
    %v66 = vsub.s32 1, %v65
    %v67 = vrot.slane %v58, %v66
    %v68 = vlaneseq
    %v69 = vshrl.u32 %v68, 7
    %v70 = vsub.s32 2, %v69
    %v71 = vrot.slane %v58, %v70
    %v72 = vlaneseq
    %v73 = vshrl.u32 %v72, 7
    %v74 = vsub.s32 3, %v73
    %v75 = vrot.slane %v58, %v74
    %vm80 = vcmask 261120
    %v82 = vsel %vm80, %v41, 0
    %84 = vmatprep.subr.mxu0 0.0
    %85 = vmatpush1.msra.mxu0 0.0
    %86 = vmatprep.subr.mxu0 0.0
    %87 = vmatpush1.msra.mxu0 0.0
    %88 = vmatprep.subr.mxu0 0.0
    %89 = vmatpush1.msra.mxu0 0.0
    %90 = vmatprep.subr.mxu0 0.0
    %91 = vmatpush1.msra.mxu0 0.0
    %92 = vmatprep.subr.mxu0 0.0
    %93 = vmatpush1.msra.mxu0 0.0
    %94 = vmatprep.subr.mxu0 0.0
    %95 = vmatpush1.msra.mxu0 0.0
    %96 = vmatprep.subr.mxu0 0.0
    %97 = vmatpush1.msra.mxu0 0.0
    %98 = vmatprep.subr.mxu0 0.0
    %99 = vmatpush1.msra.mxu0 0.0
    %100 = vmatprep.subr.mxu0 0.0
    %101 = vmatpush1.msra.mxu0 0.0
    %102 = vmatprep.subr.mxu0 0.0
    %103 = vmatpush1.msra.mxu0 0.0
    %104 = vmatprep.subr.mxu0 0.0
    %105 = vmatpush1.msra.mxu0 0.0
    %106 = vmatprep.subr.mxu0 0.0
    %107 = vmatpush1.msra.mxu0 0.0
    %108 = vmatprep.subr.mxu0 %v55
    %109 = vmatpush1.msra.mxu0 %v54
    %110 = vmatprep.subr.mxu0 %v51
    %111 = vmatpush1.msra.mxu0 %v50
    %112 = vmatprep.subr.mxu0 %v47
    %113 = vmatpush1.msra.mxu0 %v46
    %114 = vmatprep.subr.mxu0 %v43
    %115 = vmatpush1.msra.mxu0 %v42
    %116 = vmatprep.subr.mxu0 0.0
    %117 = vmatpush2.msra.mxu0 0.0
    %118 = vmatprep.subr.mxu0 0.0
    %119 = vmatpush2.msra.mxu0 0.0
    %120 = vmatprep.subr.mxu0 0.0
    %121 = vmatpush2.msra.mxu0 0.0
    %122 = vmatprep.subr.mxu0 0.0
    %123 = vmatpush2.msra.mxu0 0.0
    %124 = vmatprep.subr.mxu0 0.0
    %125 = vmatpush2.msra.mxu0 0.0
    %126 = vmatprep.subr.mxu0 0.0
    %127 = vmatpush2.msra.mxu0 0.0
    %128 = vmatprep.subr.mxu0 0.0
    %129 = vmatpush2.msra.mxu0 0.0
    %130 = vmatprep.subr.mxu0 0.0
    %131 = vmatpush2.msra.mxu0 0.0
    %132 = vmatprep.subr.mxu0 0.0
    %133 = vmatpush2.msra.mxu0 0.0
    %134 = vmatprep.subr.mxu0 0.0
    %135 = vmatpush2.msra.mxu0 0.0
    %136 = vmatprep.subr.mxu0 0.0
    %137 = vmatpush2.msra.mxu0 0.0
    %138 = vmatprep.subr.mxu0 0.0
    %139 = vmatpush2.msra.mxu0 0.0
    %140 = vmatprep.subr.mxu0 0.0
    %141 = vmatpush2.msra.mxu0 0.0
    %142 = vmatprep.subr.mxu0 0.0
    %143 = vmatpush2.msra.mxu0 0.0
    %144 = vmatprep.subr.mxu0 0.0
    %145 = vmatpush2.msra.mxu0 0.0
    %146 = vmatprep.subr.mxu0 0.0
    %147 = vmatpush2.msra.mxu0 0.0
    %148 = vmatprep.mubr.f32.mxu0 0.0
    %149 = vmatmul.mubr.f32.gmra.mxu0 %v82
    %v150 = vpop.f32.mrf.mxu0
    %v151 = vadd.f32 %v63, %v150
    %v152 = vpop.f32.mrf.mxu0
    %v153 = vadd.f32 %v67, %v152
    %154 = vdwg.mxu0
    %155 = vmatprep.subr.mxu0 0.0
    %156 = vmatpush1.msra.mxu0 0.0
    %157 = vmatprep.subr.mxu0 0.0
    %158 = vmatpush1.msra.mxu0 0.0
    %159 = vmatprep.subr.mxu0 0.0
    %160 = vmatpush1.msra.mxu0 0.0
    %161 = vmatprep.subr.mxu0 0.0
    %162 = vmatpush1.msra.mxu0 0.0
    %163 = vmatprep.subr.mxu0 0.0
    %164 = vmatpush1.msra.mxu0 0.0
    %165 = vmatprep.subr.mxu0 0.0
    %166 = vmatpush1.msra.mxu0 0.0
    %167 = vmatprep.subr.mxu0 0.0
    %168 = vmatpush1.msra.mxu0 0.0
    %169 = vmatprep.subr.mxu0 0.0
    %170 = vmatpush1.msra.mxu0 0.0
    %171 = vmatprep.subr.mxu0 0.0
    %172 = vmatpush1.msra.mxu0 0.0
    %173 = vmatprep.subr.mxu0 0.0
    %174 = vmatpush1.msra.mxu0 0.0
    %175 = vmatprep.subr.mxu0 0.0
    %176 = vmatpush1.msra.mxu0 0.0
    %177 = vmatprep.subr.mxu0 0.0
    %178 = vmatpush1.msra.mxu0 0.0
    %179 = vmatprep.subr.mxu0 %v57
    %180 = vmatpush1.msra.mxu0 %v56
    %181 = vmatprep.subr.mxu0 %v53
    %182 = vmatpush1.msra.mxu0 %v52
    %183 = vmatprep.subr.mxu0 %v49
    %184 = vmatpush1.msra.mxu0 %v48
    %185 = vmatprep.subr.mxu0 %v45
    %186 = vmatpush1.msra.mxu0 %v44
    %187 = vmatprep.subr.mxu0 0.0
    %188 = vmatpush2.msra.mxu0 0.0
    %189 = vmatprep.subr.mxu0 0.0
    %190 = vmatpush2.msra.mxu0 0.0
    %191 = vmatprep.subr.mxu0 0.0
    %192 = vmatpush2.msra.mxu0 0.0
    %193 = vmatprep.subr.mxu0 0.0
    %194 = vmatpush2.msra.mxu0 0.0
    %195 = vmatprep.subr.mxu0 0.0
    %196 = vmatpush2.msra.mxu0 0.0
    %197 = vmatprep.subr.mxu0 0.0
    %198 = vmatpush2.msra.mxu0 0.0
    %199 = vmatprep.subr.mxu0 0.0
    %200 = vmatpush2.msra.mxu0 0.0
    %201 = vmatprep.subr.mxu0 0.0
    %202 = vmatpush2.msra.mxu0 0.0
    %203 = vmatprep.subr.mxu0 0.0
    %204 = vmatpush2.msra.mxu0 0.0
    %205 = vmatprep.subr.mxu0 0.0
    %206 = vmatpush2.msra.mxu0 0.0
    %207 = vmatprep.subr.mxu0 0.0
    %208 = vmatpush2.msra.mxu0 0.0
    %209 = vmatprep.subr.mxu0 0.0
    %210 = vmatpush2.msra.mxu0 0.0
    %211 = vmatprep.subr.mxu0 0.0
    %212 = vmatpush2.msra.mxu0 0.0
    %213 = vmatprep.subr.mxu0 0.0
    %214 = vmatpush2.msra.mxu0 0.0
    %215 = vmatprep.subr.mxu0 0.0
    %216 = vmatpush2.msra.mxu0 0.0
    %217 = vmatprep.subr.mxu0 0.0
    %218 = vmatpush2.msra.mxu0 0.0
    %219 = vmatprep.mubr.f32.mxu0 0.0
    %220 = vmatmul.mubr.f32.gmra.mxu0 %v82
    %v221 = vpop.f32.mrf.mxu0
    %v222 = vadd.f32 %v71, %v221
    %v223 = vpop.f32.mrf.mxu0
    %v224 = vadd.f32 %v75, %v223
    %225 = vdwg.mxu0
    %v226 = vmax.f32 %v151, 0.0
    %v227 = vmax.f32 %v153, 0.0
    %v228 = vmax.f32 %v222, 0.0
    %v229 = vmax.f32 %v224, 0.0
    %v230 = vld [vmem:[#allocation2] sm:$0xff]
    %v231 = vld [vmem:[#allocation2 + $0x8] sm:$0xff]
    %v232 = vld [vmem:[#allocation2 + $0x10] sm:$0xff]
    %v233 = vld [vmem:[#allocation2 + $0x18] sm:$0xff]
    %v234 = vld [vmem:[#allocation2 + $0x20] sm:$0xff]
    %v235 = vld [vmem:[#allocation2 + $0x28] sm:$0xff]
    %v236 = vld [vmem:[#allocation2 + $0x30] sm:$0xff]
    %v237 = vld [vmem:[#allocation2 + $0x38] sm:$0xff]
    %v238 = vld [vmem:[#allocation2 + $0x40] sm:$0xff]
    %v239 = vld [vmem:[#allocation2 + $0x48] sm:$0xff]
    %v240 = vld [vmem:[#allocation2 + $0x50] sm:$0xff]
    %v241 = vld [vmem:[#allocation2 + $0x58] sm:$0xff]
    %v242 = vld [vmem:[#allocation2 + $0x60] sm:$0xff]
    %v243 = vld [vmem:[#allocation2 + $0x68] sm:$0xff]
    %v244 = vld [vmem:[#allocation2 + $0x70] sm:$0xff]
    %v245 = vld [vmem:[#allocation2 + $0x78] sm:$0xff]
    %v246 = vld [vmem:[#allocation2 + $0x80] sm:$0xff]
    %v247 = vld [vmem:[#allocation2 + $0x88] sm:$0xff]
    %v248 = vld [vmem:[#allocation2 + $0x90] sm:$0xff]
    %v249 = vld [vmem:[#allocation2 + $0x98] sm:$0xff]
    %v250 = vld [vmem:[#allocation2 + $0xa0] sm:$0xff]
    %v251 = vld [vmem:[#allocation2 + $0xa8] sm:$0xff]
    %v252 = vld [vmem:[#allocation2 + $0xb0] sm:$0xff]
    %v253 = vld [vmem:[#allocation2 + $0xb8] sm:$0xff]
    %v254 = vld [vmem:[#allocation2 + $0xc0] sm:$0xff]
    %v255 = vld [vmem:[#allocation2 + $0xc8] sm:$0xff]
    %v256 = vld [vmem:[#allocation2 + $0xd0] sm:$0xff]
    %v257 = vld [vmem:[#allocation2 + $0xd8] sm:$0xff]
    %v258 = vld [vmem:[#allocation2 + $0xe0] sm:$0xff]
    %v259 = vld [vmem:[#allocation2 + $0xe8] sm:$0xff]
    %v260 = vld [vmem:[#allocation2 + $0xf0] sm:$0xff]
    %v261 = vld [vmem:[#allocation2 + $0xf8] sm:$0xff]
    %v262 = vld [vmem:[#allocation2 + $0x100] sm:$0xff]
    %v263 = vld [vmem:[#allocation2 + $0x108] sm:$0xff]
    %v264 = vld [vmem:[#allocation2 + $0x110] sm:$0xff]
    %v265 = vld [vmem:[#allocation2 + $0x118] sm:$0xff]
    %v266 = vld [vmem:[#allocation2 + $0x120] sm:$0xff]
    %v267 = vld [vmem:[#allocation2 + $0x128] sm:$0xff]
    %v268 = vld [vmem:[#allocation2 + $0x130] sm:$0xff]
    %v269 = vld [vmem:[#allocation2 + $0x138] sm:$0xff]
    %v270 = vld [vmem:[#allocation2 + $0x140] sm:$0xff]
    %v271 = vld [vmem:[#allocation2 + $0x148] sm:$0xff]
    %v272 = vld [vmem:[#allocation2 + $0x150] sm:$0xff]
    %v273 = vld [vmem:[#allocation2 + $0x158] sm:$0xff]
    %v274 = vld [vmem:[#allocation2 + $0x160] sm:$0xff]
    %v275 = vld [vmem:[#allocation2 + $0x168] sm:$0xff]
    %v276 = vld [vmem:[#allocation2 + $0x170] sm:$0xff]
    %v277 = vld [vmem:[#allocation2 + $0x178] sm:$0xff]
    %v278 = vld [vmem:[#allocation2 + $0x180] sm:$0xff]
    %v279 = vld [vmem:[#allocation2 + $0x188] sm:$0xff]
    %v280 = vld [vmem:[#allocation2 + $0x190] sm:$0xff]
    %v281 = vld [vmem:[#allocation2 + $0x198] sm:$0xff]
    %v282 = vld [vmem:[#allocation2 + $0x1a0] sm:$0xff]
    %v283 = vld [vmem:[#allocation2 + $0x1a8] sm:$0xff]
    %v284 = vld [vmem:[#allocation2 + $0x1b0] sm:$0xff]
    %v285 = vld [vmem:[#allocation2 + $0x1b8] sm:$0xff]
    %v286 = vld [vmem:[#allocation2 + $0x1c0] sm:$0xff]
    %v287 = vld [vmem:[#allocation2 + $0x1c8] sm:$0xff]
    %v288 = vld [vmem:[#allocation2 + $0x1d0] sm:$0xff]
    %v289 = vld [vmem:[#allocation2 + $0x1d8] sm:$0xff]
    %v290 = vld [vmem:[#allocation2 + $0x1e0] sm:$0xff]
    %v291 = vld [vmem:[#allocation2 + $0x1e8] sm:$0xff]
    %v292 = vld [vmem:[#allocation2 + $0x1f0] sm:$0xff]
    %v293 = vld [vmem:[#allocation2 + $0x1f8] sm:$0xff]
    %v294 = vld [vmem:[#allocation2 + $0x200] sm:$0xff]
    %v295 = vld [vmem:[#allocation2 + $0x208] sm:$0xff]
    %v296 = vld [vmem:[#allocation2 + $0x210] sm:$0xff]
    %v297 = vld [vmem:[#allocation2 + $0x218] sm:$0xff]
    %v298 = vld [vmem:[#allocation2 + $0x220] sm:$0xff]
    %v299 = vld [vmem:[#allocation2 + $0x228] sm:$0xff]
    %v300 = vld [vmem:[#allocation2 + $0x230] sm:$0xff]
    %v301 = vld [vmem:[#allocation2 + $0x238] sm:$0xff]
    %v302 = vld [vmem:[#allocation2 + $0x240] sm:$0xff]
    %v303 = vld [vmem:[#allocation2 + $0x248] sm:$0xff]
    %v304 = vld [vmem:[#allocation2 + $0x250] sm:$0xff]
    %v305 = vld [vmem:[#allocation2 + $0x258] sm:$0xff]
    %v306 = vld [vmem:[#allocation2 + $0x260] sm:$0xff]
    %v307 = vld [vmem:[#allocation2 + $0x268] sm:$0xff]
    %v308 = vld [vmem:[#allocation2 + $0x270] sm:$0xff]
    %v309 = vld [vmem:[#allocation2 + $0x278] sm:$0xff]
    %v310 = vld [vmem:[#allocation2 + $0x280] sm:$0xff]
    %v311 = vld [vmem:[#allocation2 + $0x288] sm:$0xff]
    %v312 = vld [vmem:[#allocation2 + $0x290] sm:$0xff]
    %v313 = vld [vmem:[#allocation2 + $0x298] sm:$0xff]
    %v314 = vld [vmem:[#allocation2 + $0x2a0] sm:$0xff]
    %v315 = vld [vmem:[#allocation2 + $0x2a8] sm:$0xff]
    %v316 = vld [vmem:[#allocation2 + $0x2b0] sm:$0xff]
    %v317 = vld [vmem:[#allocation2 + $0x2b8] sm:$0xff]
    %v318 = vld [vmem:[#allocation2 + $0x2c0] sm:$0xff]
    %v319 = vld [vmem:[#allocation2 + $0x2c8] sm:$0xff]
    %v320 = vld [vmem:[#allocation2 + $0x2d0] sm:$0xff]
    %v321 = vld [vmem:[#allocation2 + $0x2d8] sm:$0xff]
    %v322 = vld [vmem:[#allocation2 + $0x2e0] sm:$0xff]
    %v323 = vld [vmem:[#allocation2 + $0x2e8] sm:$0xff]
    %v324 = vld [vmem:[#allocation2 + $0x2f0] sm:$0xff]
    %v325 = vld [vmem:[#allocation2 + $0x2f8] sm:$0xff]
    %v326 = vld [vmem:[#allocation2 + $0x300] sm:$0xff]
    %v327 = vld [vmem:[#allocation2 + $0x308] sm:$0xff]
    %v328 = vld [vmem:[#allocation2 + $0x310] sm:$0xff]
    %v329 = vld [vmem:[#allocation2 + $0x318] sm:$0xff]
    %v330 = vld [vmem:[#allocation2 + $0x320] sm:$0xff]
    %v331 = vld [vmem:[#allocation2 + $0x328] sm:$0xff]
    %v332 = vld [vmem:[#allocation2 + $0x330] sm:$0xff]
    %v333 = vld [vmem:[#allocation2 + $0x338] sm:$0xff]
    %v334 = vld [vmem:[#allocation2 + $0x340] sm:$0xff]
    %v335 = vld [vmem:[#allocation2 + $0x348] sm:$0xff]
    %v336 = vld [vmem:[#allocation2 + $0x350] sm:$0xff]
    %v337 = vld [vmem:[#allocation2 + $0x358] sm:$0xff]
    %v338 = vld [vmem:[#allocation2 + $0x360] sm:$0xff]
    %v339 = vld [vmem:[#allocation2 + $0x368] sm:$0xff]
    %v340 = vld [vmem:[#allocation2 + $0x370] sm:$0xff]
    %v341 = vld [vmem:[#allocation2 + $0x378] sm:$0xff]
    %v342 = vld [vmem:[#allocation2 + $0x380] sm:$0xff]
    %v343 = vld [vmem:[#allocation2 + $0x388] sm:$0xff]
    %v344 = vld [vmem:[#allocation2 + $0x390] sm:$0xff]
    %v345 = vld [vmem:[#allocation2 + $0x398] sm:$0xff]
    %v346 = vld [vmem:[#allocation2 + $0x3a0] sm:$0xff]
    %v347 = vld [vmem:[#allocation2 + $0x3a8] sm:$0xff]
    %v348 = vld [vmem:[#allocation2 + $0x3b0] sm:$0xff]
    %v349 = vld [vmem:[#allocation2 + $0x3b8] sm:$0xff]
    %v350 = vld [vmem:[#allocation2 + $0x3c0] sm:$0xff]
    %v351 = vld [vmem:[#allocation2 + $0x3c8] sm:$0xff]
    %v352 = vld [vmem:[#allocation2 + $0x3d0] sm:$0xff]
    %v353 = vld [vmem:[#allocation2 + $0x3d8] sm:$0xff]
    %v354 = vld [vmem:[#allocation2 + $0x3e0] sm:$0xff]
    %v355 = vld [vmem:[#allocation2 + $0x3e8] sm:$0xff]
    %v356 = vld [vmem:[#allocation2 + $0x3f0] sm:$0xff]
    %v357 = vld [vmem:[#allocation2 + $0x3f8] sm:$0xff]
    %v358 = vld [vmem:[%s4] sm:$0x3]
    %v360 = vlaneseq
    %v361 = vshrl.u32 %v360, 7
    %v362 = vsub.s32 0, %v361
    %v363 = vrot.slane %v358, %v362
    %v364 = vlaneseq
    %v365 = vshrl.u32 %v364, 7
    %v366 = vsub.s32 1, %v365
    %v367 = vrot.slane %v358, %v366
    %370 = vmatprep.subr.mxu0 %v261
    %371 = vmatpush1.msra.mxu0 %v260
    %372 = vmatprep.subr.mxu0 %v259
    %373 = vmatpush1.msra.mxu0 %v258
    %374 = vmatprep.subr.mxu0 %v257
    %375 = vmatpush1.msra.mxu0 %v256
    %376 = vmatprep.subr.mxu0 %v255
    %377 = vmatpush1.msra.mxu0 %v254
    %378 = vmatprep.subr.mxu0 %v253
    %379 = vmatpush1.msra.mxu0 %v252
    %380 = vmatprep.subr.mxu0 %v251
    %381 = vmatpush1.msra.mxu0 %v250
    %382 = vmatprep.subr.mxu0 %v249
    %383 = vmatpush1.msra.mxu0 %v248
    %384 = vmatprep.subr.mxu0 %v247
    %385 = vmatpush1.msra.mxu0 %v246
    %386 = vmatprep.subr.mxu0 %v245
    %387 = vmatpush1.msra.mxu0 %v244
    %388 = vmatprep.subr.mxu0 %v243
    %389 = vmatpush1.msra.mxu0 %v242
    %390 = vmatprep.subr.mxu0 %v241
    %391 = vmatpush1.msra.mxu0 %v240
    %392 = vmatprep.subr.mxu0 %v239
    %393 = vmatpush1.msra.mxu0 %v238
    %394 = vmatprep.subr.mxu0 %v237
    %395 = vmatpush1.msra.mxu0 %v236
    %396 = vmatprep.subr.mxu0 %v235
    %397 = vmatpush1.msra.mxu0 %v234
    %398 = vmatprep.subr.mxu0 %v233
    %399 = vmatpush1.msra.mxu0 %v232
    %400 = vmatprep.subr.mxu0 %v231
    %401 = vmatpush1.msra.mxu0 %v230
    %402 = vmatprep.subr.mxu0 %v293
    %403 = vmatpush2.msra.mxu0 %v292
    %404 = vmatprep.subr.mxu0 %v291
    %405 = vmatpush2.msra.mxu0 %v290
    %406 = vmatprep.subr.mxu0 %v289
    %407 = vmatpush2.msra.mxu0 %v288
    %408 = vmatprep.subr.mxu0 %v287
    %409 = vmatpush2.msra.mxu0 %v286
    %410 = vmatprep.subr.mxu0 %v285
    %411 = vmatpush2.msra.mxu0 %v284
    %412 = vmatprep.subr.mxu0 %v283
    %413 = vmatpush2.msra.mxu0 %v282
    %414 = vmatprep.subr.mxu0 %v281
    %415 = vmatpush2.msra.mxu0 %v280
    %416 = vmatprep.subr.mxu0 %v279
    %417 = vmatpush2.msra.mxu0 %v278
    %418 = vmatprep.subr.mxu0 %v277
    %419 = vmatpush2.msra.mxu0 %v276
    %420 = vmatprep.subr.mxu0 %v275
    %421 = vmatpush2.msra.mxu0 %v274
    %422 = vmatprep.subr.mxu0 %v273
    %423 = vmatpush2.msra.mxu0 %v272
    %424 = vmatprep.subr.mxu0 %v271
    %425 = vmatpush2.msra.mxu0 %v270
    %426 = vmatprep.subr.mxu0 %v269
    %427 = vmatpush2.msra.mxu0 %v268
    %428 = vmatprep.subr.mxu0 %v267
    %429 = vmatpush2.msra.mxu0 %v266
    %430 = vmatprep.subr.mxu0 %v265
    %431 = vmatpush2.msra.mxu0 %v264
    %432 = vmatprep.subr.mxu0 %v263
    %433 = vmatpush2.msra.mxu0 %v262
    %434 = vmatprep.mubr.f32.mxu0 %v227
    %435 = vmatmul.mubr.f32.gmra.mxu0 %v226
    %v436 = vpop.f32.mrf.mxu0
    %v437 = vadd.f32 %v363, %v436
    %v438 = vpop.f32.mrf.mxu0
    %v439 = vadd.f32 %v367, %v438
    %440 = vdwg.mxu0
    %441 = vmatprep.subr.mxu0 %v325
    %442 = vmatpush1.msra.mxu0 %v324
    %443 = vmatprep.subr.mxu0 %v323
    %444 = vmatpush1.msra.mxu0 %v322
    %445 = vmatprep.subr.mxu0 %v321
    %446 = vmatpush1.msra.mxu0 %v320
    %447 = vmatprep.subr.mxu0 %v319
    %448 = vmatpush1.msra.mxu0 %v318
    %449 = vmatprep.subr.mxu0 %v317
    %450 = vmatpush1.msra.mxu0 %v316
    %451 = vmatprep.subr.mxu0 %v315
    %452 = vmatpush1.msra.mxu0 %v314
    %453 = vmatprep.subr.mxu0 %v313
    %454 = vmatpush1.msra.mxu0 %v312
    %455 = vmatprep.subr.mxu0 %v311
    %456 = vmatpush1.msra.mxu0 %v310
    %457 = vmatprep.subr.mxu0 %v309
    %458 = vmatpush1.msra.mxu0 %v308
    %459 = vmatprep.subr.mxu0 %v307
    %460 = vmatpush1.msra.mxu0 %v306
    %461 = vmatprep.subr.mxu0 %v305
    %462 = vmatpush1.msra.mxu0 %v304
    %463 = vmatprep.subr.mxu0 %v303
    %464 = vmatpush1.msra.mxu0 %v302
    %465 = vmatprep.subr.mxu0 %v301
    %466 = vmatpush1.msra.mxu0 %v300
    %467 = vmatprep.subr.mxu0 %v299
    %468 = vmatpush1.msra.mxu0 %v298
    %469 = vmatprep.subr.mxu0 %v297
    %470 = vmatpush1.msra.mxu0 %v296
    %471 = vmatprep.subr.mxu0 %v295
    %472 = vmatpush1.msra.mxu0 %v294
    %473 = vmatprep.subr.mxu0 %v357
    %474 = vmatpush2.msra.mxu0 %v356
    %475 = vmatprep.subr.mxu0 %v355
    %476 = vmatpush2.msra.mxu0 %v354
    %477 = vmatprep.subr.mxu0 %v353
    %478 = vmatpush2.msra.mxu0 %v352
    %479 = vmatprep.subr.mxu0 %v351
    %480 = vmatpush2.msra.mxu0 %v350
    %481 = vmatprep.subr.mxu0 %v349
    %482 = vmatpush2.msra.mxu0 %v348
    %483 = vmatprep.subr.mxu0 %v347
    %484 = vmatpush2.msra.mxu0 %v346
    %485 = vmatprep.subr.mxu0 %v345
    %486 = vmatpush2.msra.mxu0 %v344
    %487 = vmatprep.subr.mxu0 %v343
    %488 = vmatpush2.msra.mxu0 %v342
    %489 = vmatprep.subr.mxu0 %v341
    %490 = vmatpush2.msra.mxu0 %v340
    %491 = vmatprep.subr.mxu0 %v339
    %492 = vmatpush2.msra.mxu0 %v338
    %493 = vmatprep.subr.mxu0 %v337
    %494 = vmatpush2.msra.mxu0 %v336
    %495 = vmatprep.subr.mxu0 %v335
    %496 = vmatpush2.msra.mxu0 %v334
    %497 = vmatprep.subr.mxu0 %v333
    %498 = vmatpush2.msra.mxu0 %v332
    %499 = vmatprep.subr.mxu0 %v331
    %500 = vmatpush2.msra.mxu0 %v330
    %501 = vmatprep.subr.mxu0 %v329
    %502 = vmatpush2.msra.mxu0 %v328
    %503 = vmatprep.subr.mxu0 %v327
    %504 = vmatpush2.msra.mxu0 %v326
    %505 = vmatprep.mubr.f32.mxu0 %v229
    %506 = vmatmul.mubr.f32.gmra.mxu0 %v228
    %v507 = vpop.f32.mrf.mxu0
    %v508 = vadd.f32 %v437, %v507
    %v509 = vpop.f32.mrf.mxu0
    %v510 = vadd.f32 %v439, %v509
    %511 = vdwg.mxu0
    %v512 = vmax.f32 %v508, 0.0
    %v513 = vmax.f32 %v510, 0.0
    %v514 = vld [vmem:[%s5] sm:$0xff]
    %v515 = vld [vmem:[%s5 + $0x8] sm:$0xff]
    %v516 = vld [vmem:[%s5 + $0x10] sm:$0xff]
    %v517 = vld [vmem:[%s5 + $0x18] sm:$0xff]
    %v518 = vld [vmem:[%s5 + $0x20] sm:$0xff]
    %v519 = vld [vmem:[%s5 + $0x28] sm:$0xff]
    %v520 = vld [vmem:[%s5 + $0x30] sm:$0xff]
    %v521 = vld [vmem:[%s5 + $0x38] sm:$0xff]
    %v522 = vld [vmem:[%s5 + $0x40] sm:$0xff]
    %v523 = vld [vmem:[%s5 + $0x48] sm:$0xff]
    %v524 = vld [vmem:[%s5 + $0x50] sm:$0xff]
    %v525 = vld [vmem:[%s5 + $0x58] sm:$0xff]
    %v526 = vld [vmem:[%s5 + $0x60] sm:$0xff]
    %v527 = vld [vmem:[%s5 + $0x68] sm:$0xff]
    %v528 = vld [vmem:[%s5 + $0x70] sm:$0xff]
    %v529 = vld [vmem:[%s5 + $0x78] sm:$0xff]
    %v530 = vld [vmem:[%s5 + $0x80] sm:$0xff]
    %v531 = vld [vmem:[%s5 + $0x88] sm:$0xff]
    %v532 = vld [vmem:[%s5 + $0x90] sm:$0xff]
    %v533 = vld [vmem:[%s5 + $0x98] sm:$0xff]
    %v534 = vld [vmem:[%s5 + $0xa0] sm:$0xff]
    %v535 = vld [vmem:[%s5 + $0xa8] sm:$0xff]
    %v536 = vld [vmem:[%s5 + $0xb0] sm:$0xff]
    %v537 = vld [vmem:[%s5 + $0xb8] sm:$0xff]
    %v538 = vld [vmem:[%s5 + $0xc0] sm:$0xff]
    %v539 = vld [vmem:[%s5 + $0xc8] sm:$0xff]
    %v540 = vld [vmem:[%s5 + $0xd0] sm:$0xff]
    %v541 = vld [vmem:[%s5 + $0xd8] sm:$0xff]
    %v542 = vld [vmem:[%s5 + $0xe0] sm:$0xff]
    %v543 = vld [vmem:[%s5 + $0xe8] sm:$0xff]
    %v544 = vld [vmem:[%s5 + $0xf0] sm:$0xff]
    %v545 = vld [vmem:[%s5 + $0xf8] sm:$0xff]
    %v546 = vld [vmem:[%s6] sm:$0x1]
    %v548 = vlaneseq
    %v549 = vshrl.u32 %v548, 7
    %v550 = vsub.s32 0, %v549
    %v551 = vrot.slane %v546, %v550
    %553 = vmatprep.subr.mxu0 0.0
    %554 = vmatpush1.msra.mxu0 %v529
    %555 = vmatprep.subr.mxu0 0.0
    %556 = vmatpush1.msra.mxu0 %v528
    %557 = vmatprep.subr.mxu0 0.0
    %558 = vmatpush1.msra.mxu0 %v527
    %559 = vmatprep.subr.mxu0 0.0
    %560 = vmatpush1.msra.mxu0 %v526
    %561 = vmatprep.subr.mxu0 0.0
    %562 = vmatpush1.msra.mxu0 %v525
    %563 = vmatprep.subr.mxu0 0.0
    %564 = vmatpush1.msra.mxu0 %v524
    %565 = vmatprep.subr.mxu0 0.0
    %566 = vmatpush1.msra.mxu0 %v523
    %567 = vmatprep.subr.mxu0 0.0
    %568 = vmatpush1.msra.mxu0 %v522
    %569 = vmatprep.subr.mxu0 0.0
    %570 = vmatpush1.msra.mxu0 %v521
    %571 = vmatprep.subr.mxu0 0.0
    %572 = vmatpush1.msra.mxu0 %v520
    %573 = vmatprep.subr.mxu0 0.0
    %574 = vmatpush1.msra.mxu0 %v519
    %575 = vmatprep.subr.mxu0 0.0
    %576 = vmatpush1.msra.mxu0 %v518
    %577 = vmatprep.subr.mxu0 0.0
    %578 = vmatpush1.msra.mxu0 %v517
    %579 = vmatprep.subr.mxu0 0.0
    %580 = vmatpush1.msra.mxu0 %v516
    %581 = vmatprep.subr.mxu0 0.0
    %582 = vmatpush1.msra.mxu0 %v515
    %583 = vmatprep.subr.mxu0 0.0
    %584 = vmatpush1.msra.mxu0 %v514
    %585 = vmatprep.subr.mxu0 0.0
    %586 = vmatpush2.msra.mxu0 %v545
    %587 = vmatprep.subr.mxu0 0.0
    %588 = vmatpush2.msra.mxu0 %v544
    %589 = vmatprep.subr.mxu0 0.0
    %590 = vmatpush2.msra.mxu0 %v543
    %591 = vmatprep.subr.mxu0 0.0
    %592 = vmatpush2.msra.mxu0 %v542
    %593 = vmatprep.subr.mxu0 0.0
    %594 = vmatpush2.msra.mxu0 %v541
    %595 = vmatprep.subr.mxu0 0.0
    %596 = vmatpush2.msra.mxu0 %v540
    %597 = vmatprep.subr.mxu0 0.0
    %598 = vmatpush2.msra.mxu0 %v539
    %599 = vmatprep.subr.mxu0 0.0
    %600 = vmatpush2.msra.mxu0 %v538
    %601 = vmatprep.subr.mxu0 0.0
    %602 = vmatpush2.msra.mxu0 %v537
    %603 = vmatprep.subr.mxu0 0.0
    %604 = vmatpush2.msra.mxu0 %v536
    %605 = vmatprep.subr.mxu0 0.0
    %606 = vmatpush2.msra.mxu0 %v535
    %607 = vmatprep.subr.mxu0 0.0
    %608 = vmatpush2.msra.mxu0 %v534
    %609 = vmatprep.subr.mxu0 0.0
    %610 = vmatpush2.msra.mxu0 %v533
    %611 = vmatprep.subr.mxu0 0.0
    %612 = vmatpush2.msra.mxu0 %v532
    %613 = vmatprep.subr.mxu0 0.0
    %614 = vmatpush2.msra.mxu0 %v531
    %615 = vmatprep.subr.mxu0 0.0
    %616 = vmatpush2.msra.mxu0 %v530
    %617 = vmatprep.mubr.f32.mxu0 %v513
    %618 = vmatmul.mubr.f32.gmra.mxu0 %v512
    %v619 = vpop.f32.mrf.mxu0
    %v620 = vadd.f32 %v551, %v619
    %v621 = vpop.f32.mrf.mxu0
    %622 = vdwg.mxu0
    %623 = vst [vmem:[#allocation5] sm:$0xff] %v620
    // Predicated region
    $region34: #{encoder_forward.1} parent=1 // pred_check
      _
    $region35: #{encoder_forward.1} parent=1 // pred_check_branch
      %625 = sbr.rel (0) target = $region37
    $region36: #{encoder_forward.1} parent=1 // pred_region
      %s627 = ssub.s32 128, 128
      %628 = vsyncadd [#allocation4], %s627
      %s630 = sshll.u32 [#allocation5], 4
      %s631 = int_to_ptr.vmem [resolvable:$true] %s630
      %633 = dma.vmem_to_hbm [thread:$0]  %s631, 128, %s7, [#allocation4]
    $region37: #{encoder_forward.1} parent=1 // pred_fallthru
      _
    // Predicated region
    $region38: #{encoder_forward.1} parent=1 // pred_check
      _
    $region39: #{encoder_forward.1} parent=1 // pred_check_branch
      %635 = sbr.rel (0) target = $region41
    $region40: #{encoder_forward.1} parent=1 // pred_region
      %636 = dma.done [#allocation4], 128
    $region41: #{encoder_forward.1} parent=1 // pred_fallthru
      _
    %637 = vsyncpa [#allocation3], 1
    %638 = vsyncpa [#allocation4], 1

</llo_original>
